<compile_context>
chip_gen: v5e
topology: v5e:2x2
jax: 0.10.0
libtpu: 0.0.40
codegen_flags: <defaults>
</compile_context>

<pallas_src>
import jax
import jax.numpy as jnp
from jax.experimental import pallas as pl
from jax.experimental.pallas import tpu as pltpu


# ----------------------------------------------------------------------------- kernel
def _identity_kernel(x_ref, o_ref):
    # Per-tile copy: (tm, L) VMEM block in -> (tm, L) VMEM block out.
    o_ref[...] = x_ref[...]


# ----------------------------------------------------------------------------- layout
def _choose_layout(n, itemsize):
    """Pick (lane_width L, row_tile tm, padded_rows) for a lane-dense copy.

    L is a multiple of 128 (prefer one that divides n exactly, widest first),
    tm is a multiple of the dtype sublane pack factor, and each (tm, L) block
    is ~<= 2 MiB so the double-buffered footprint fits every generation's
    scoped-VMEM budget.
    """
    pack = 8 * max(1, 4 // itemsize)          # 8 f32, 16 bf16, 32 int8/fp8
    rows = None
    for L in (4096, 2048, 1024, 512, 256, 128):
        if n % L == 0 and (n // L) % pack == 0:
            rows = n // L
            break
    if rows is None:                          # ragged: fall back and pad
        L = 512
        rows = pl.cdiv(n, L)

    target_block_bytes = 2 * 1024 * 1024      # ~2 MiB per block
    max_rows = max(pack, target_block_bytes // (L * itemsize))
    rows_up = pl.cdiv(rows, pack) * pack
    tm = min(rows_up, max_rows)
    tm = max(pack, (tm // pack) * pack)       # multiple of pack factor
    padded_rows = pl.cdiv(rows, tm) * tm
    return L, tm, padded_rows


# ----------------------------------------------------------------------------- wrapper
def dummy_weight_forward(x, weight):
    """Pallas equivalent of DummyWeight.forward: returns x unchanged.

    `weight` (shape (dim,)) mirrors the module's nn.Parameter; it is held but
    intentionally unused in the forward pass, exactly like the PyTorch module.
    NOTE: in production the zero-cost path is simply `return x`; the tiled
    copy below exists only because a kernel launch is required here.
    """
    del weight  # unused in forward, by spec

    orig_shape = x.shape
    n = x.size
    itemsize = jnp.dtype(x.dtype).itemsize
    L, tm, padded_rows = _choose_layout(n, itemsize)
    padded_n = padded_rows * L

    flat = x.reshape(-1)
    if padded_n != n:
        flat = jnp.pad(flat, (0, padded_n - n))
    x2 = flat.reshape(padded_rows, L)

    out2 = pl.pallas_call(
        _identity_kernel,
        out_shape=jax.ShapeDtypeStruct((padded_rows, L), x.dtype),
        grid=(padded_rows // tm,),
        in_specs=[pl.BlockSpec((tm, L), lambda i: (i, 0))],
        out_specs=pl.BlockSpec((tm, L), lambda i: (i, 0)),
        compiler_params=pltpu.CompilerParams(
            dimension_semantics=("parallel",),
            vmem_limit_bytes=32 * 1024 * 1024,
        ),
    )(x2)

    out_flat = out2.reshape(-1)
    if padded_n != n:
        out_flat = out_flat[:n]
    return out_flat.reshape(orig_shape)


# ----------------------------------------------------------------------------- reference
def reference_forward(x, weight):
    """Pure-JAX transcription of DummyWeight.forward (identity)."""
    del weight
    return x


# ----------------------------------------------------------------------------- main
if __name__ == "__main__":
    # Small shapes consistent with the module: dim = channels of the input.
    B, N, dim = 2, 16, 32

    key = jax.random.PRNGKey(0)
    kx, kw = jax.random.split(key, 2)

    # The module's held parameter (torch.randn(dim) analogue) — unused in forward.
    weight = jax.random.normal(kw, (dim,), jnp.float32)
    x = jax.random.normal(kx, (B, N, dim), jnp.float32)

    out = dummy_weight_forward(x, weight)
    out = jax.block_until_ready(out)

    ref = reference_forward(x, weight)
    assert out.shape == x.shape
    assert out.dtype == x.dtype
    assert jnp.array_equal(out, ref), (
        f"max abs err {float(jnp.max(jnp.abs(out - ref)))}")

    print("KERNEL_OK")
</pallas_src>

<mosaic_0001>
module attributes {stable_mosaic.version = 11 : i64} {
  func.func @_identity_kernel(%arg0: i32, %arg1: memref<8x128xf32, #tpu.memory_space<vmem>>, %arg2: memref<8x128xf32, #tpu.memory_space<vmem>>) attributes {dimension_semantics = [#tpu.dimension_semantics<parallel>], iteration_bounds = array<i64: 1>, scalar_prefetch = 0 : i64, scratch_operands = 0 : i64, tpu.core_type = #tpu.core_type<tc>, window_params = [{transform_indices = @transform_0, window_bounds = array<i64: 8, 128>}, {transform_indices = @transform_1, window_bounds = array<i64: 8, 128>}]} {
    %c0 = arith.constant 0 : index
    %c0_0 = arith.constant 0 : index
    %0 = vector.load %arg1[%c0, %c0_0] : memref<8x128xf32, #tpu.memory_space<vmem>>, vector<8x128xf32>
    %c0_1 = arith.constant 0 : index
    %c0_2 = arith.constant 0 : index
    %1 = vector.load %arg2[%c0_1, %c0_2] : memref<8x128xf32, #tpu.memory_space<vmem>>, vector<8x128xf32>
    tpu.vector_store %arg2[%c0_1, %c0_2], %0 {strides = array<i32>} : memref<8x128xf32, #tpu.memory_space<vmem>>, vector<8x128xf32>,
    return
  }
  func.func @transform_0(%arg0: i32) -> (i32, i32) {
    %c0_i32 = arith.constant 0 : i32
    %c0_i32_0 = arith.constant 0 : i32
    return %arg0, %c0_i32 : i32, i32
  }
  func.func @transform_1(%arg0: i32) -> (i32, i32) {
    %c0_i32 = arith.constant 0 : i32
    %c0_i32_0 = arith.constant 0 : i32
    return %arg0, %c0_i32 : i32, i32
  }
}

</mosaic_0001>

<llo_original>
// kernel: tpu_custom_call.1
$region0: #{tpu_custom_call.1}
  #allocation0 [shape = 'u32[]', space=smem, size = 0x4, offset = 0x4, fixed_abs, tag = 'smem constant byte address 0x4 - core index']
  #allocation1 [shape = 'u32[72,128]{1,0:T(1,128)}', space=vmem, size = 0x9000, scoped, tag = 'internal scratch']
  %s0 = inlined_call_operand.hbm [shape: f32[8,128], index: 0, kind: input, shape index: {}]
  %s1 = inlined_call_operand.hbm [shape: f32[8,128], index: 1, kind: output, shape index: {}]
  %s2 = sld [smem:[#allocation0]]
  $region18: #{tpu_custom_call.1} parent=0
    _
  %s4 = ssub.s32 1, %s2
  %s5 = scalar_select 0, %s4, %s2
  $region1: #{tpu_custom_call.1} parent=0
    #allocation2 [shape = 'u8[4096]{0}', space=vmem, size = 0x1000, scoped, tag = 'input window, operand 0, single buffered']
    #allocation3 [shape = 's32[1]{0}', space=sflag, size = 0x4, scoped, tag = 'scoped memory for tpu_custom_call.1']
    #allocation4 [shape = 's32[1]{0}', space=sflag, size = 0x4, scoped, tag = 'scoped memory for tpu_custom_call.1']
    #allocation5 [shape = 'u8[4096]{0}', space=vmem, size = 0x1000, scoped, tag = 'output window, operand 0, single buffered']
    %6 = vsyncpa [#allocation3], 0
    %7 = vsyncpa [#allocation4], 0
    // Predicated region
    $region2: #{tpu_custom_call.1} parent=1 // pred_check
      _
    $region3: #{tpu_custom_call.1} parent=1 // pred_check_branch
      %9 = sbr.rel (0) target = $region5
    $region4: #{tpu_custom_call.1} parent=1 // pred_region
      %11 = vsyncadd [#allocation3], 0
      %s13 = sshll.u32 %s0, 4
      %s14 = int_to_ptr.hbm [resolvable:$true] %s13
      %s15 = sshll.u32 [#allocation2], 4
      %s16 = int_to_ptr.vmem [resolvable:$true] %s15
      %18 = dma.hbm_to_vmem [thread:$0]  %s14, 128, %s16, [#allocation3]
    $region5: #{tpu_custom_call.1} parent=1 // pred_fallthru
      _
    // Predicated region
    $region6: #{tpu_custom_call.1} parent=1 // pred_check
      _
    $region7: #{tpu_custom_call.1} parent=1 // pred_check_branch
      %20 = sbr.rel (0) target = $region9
    $region8: #{tpu_custom_call.1} parent=1 // pred_region
      %22 = dma.done [#allocation3], 128
    $region9: #{tpu_custom_call.1} parent=1 // pred_fallthru
      _
    %v23 = vld [vmem:[#allocation2] sm:$0xff]
    %24 = vst [vmem:[#allocation5] sm:$0xff] %v23
    // Predicated region
    $region10: #{tpu_custom_call.1} parent=1 // pred_check
      _
    $region11: #{tpu_custom_call.1} parent=1 // pred_check_branch
      %26 = sbr.rel (0) target = $region13
    $region12: #{tpu_custom_call.1} parent=1 // pred_region
      %28 = vsyncadd [#allocation4], 0
      %s30 = sshll.u32 [#allocation5], 4
      %s31 = int_to_ptr.vmem [resolvable:$true] %s30
      %s32 = sshll.u32 %s1, 4
      %s33 = int_to_ptr.hbm [resolvable:$true] %s32
      %35 = dma.vmem_to_hbm [thread:$0]  %s31, 128, %s33, [#allocation4]
    $region13: #{tpu_custom_call.1} parent=1 // pred_fallthru
      _
    // Predicated region
    $region14: #{tpu_custom_call.1} parent=1 // pred_check
      _
    $region15: #{tpu_custom_call.1} parent=1 // pred_check_branch
      %37 = sbr.rel (0) target = $region17
    $region16: #{tpu_custom_call.1} parent=1 // pred_region
      %39 = dma.done [#allocation4], 128
    $region17: #{tpu_custom_call.1} parent=1 // pred_fallthru
      _
    %40 = vsyncpa [#allocation3], 1
    %41 = vsyncpa [#allocation4], 1

</llo_original>
